<compile_context>
chip_gen: v6e
topology: v6e:2x2x1
jax: 0.10.0
libtpu: 0.0.40
codegen_flags: <defaults>
</compile_context>

<pallas_src>
import jax
import jax.numpy as jnp
from jax.experimental import pallas as pl
from jax.experimental.pallas import tpu as pltpu

INPUT_FEATURES = 4      # CartPole-v0 observation_space.shape[0]
OUTPUT_FEATURES = 2     # CartPole-v0 action_space.n
HIDDEN = 128
HEAD_OUT = OUTPUT_FEATURES + 1   # fused advantage (2) + value (1) head


def dueling_qnet_kernel(x_ref, w1_ref, b1_ref, wh_ref, bh_ref, out_ref):
    B = x_ref.shape[0]

    x = x_ref[...]                       # (B, 4)  f32
    w1 = w1_ref[...]                     # (4, 128)

    # First layer on the VPU: K=4 contraction as 4 broadcast multiply-adds.
    acc = x[:, 0:1] * w1[0:1, :]                          # (B,1)*(1,128) -> (B,128)
    for k in range(1, INPUT_FEATURES):                    # static unrolled (4 terms)
        acc = acc + x[:, k:k + 1] * w1[k:k + 1, :]
    h = jnp.tanh(acc + b1_ref[...])                       # (B, 128), tanh on EUP

    # Fused heads: one (B,128) @ (128,3) MXU matmul instead of two tiny ones.
    heads = jnp.dot(h, wh_ref[...],
                    preferred_element_type=jnp.float32) + bh_ref[...]   # (B, 3)
    adv = heads[:, 0:OUTPUT_FEATURES]                     # (B, 2)
    val = heads[:, OUTPUT_FEATURES:OUTPUT_FEATURES + 1]   # (B, 1)

    # Global mean over ALL adv elements (matches the PyTorch module exactly).
    inv_count = 1.0 / float(B * OUTPUT_FEATURES)          # compile-time constant
    adv_mean = jnp.sum(adv) * inv_count                   # scalar

    out_ref[...] = val + adv - adv_mean                   # (B, 2) via broadcast


def dueling_qnet_forward(x, w1, b1, w_head, b_head):
    """x: (B, 4) f32. w1: (4,128), b1: (1,128), w_head: (128,3), b_head: (1,3).
    Returns (B, 2) f32."""
    B = x.shape[0]
    vmem = pl.BlockSpec(memory_space=pltpu.MemorySpace.VMEM)

    flops = (
        2 * B * INPUT_FEATURES * HIDDEN          # first layer FMAs (on VPU)
        + 2 * B * HIDDEN * HEAD_OUT              # fused head matmul
        + B * HIDDEN                             # +b1
        + B * HEAD_OUT                           # +b_head
        + 4 * B * OUTPUT_FEATURES                # mean/sub/add epilogue
    )
    bytes_accessed = 4 * (x.size + w1.size + b1.size + w_head.size
                          + b_head.size + B * OUTPUT_FEATURES)
    cost = pl.CostEstimate(flops=int(flops),
                           transcendentals=int(B * HIDDEN),
                           bytes_accessed=int(bytes_accessed))

    return pl.pallas_call(
        dueling_qnet_kernel,
        out_shape=jax.ShapeDtypeStruct((B, OUTPUT_FEATURES), jnp.float32),
        in_specs=[vmem, vmem, vmem, vmem, vmem],
        out_specs=vmem,
        cost_estimate=cost,
    )(x, w1, b1, w_head, b_head)


def init_params(key):
    """Deterministic init mimicking PyTorch nn.Linear default:
    U(-1/sqrt(fan_in), +1/sqrt(fan_in)). Weights stored as (in, out)."""
    ks = jax.random.split(key, 6)

    def linear(kw, kb, fan_in, fan_out):
        bound = 1.0 / jnp.sqrt(jnp.float32(fan_in))
        w = jax.random.uniform(kw, (fan_in, fan_out), jnp.float32, -bound, bound)
        b = jax.random.uniform(kb, (1, fan_out), jnp.float32, -bound, bound)
        return w, b

    w1, b1 = linear(ks[0], ks[1], INPUT_FEATURES, HIDDEN)
    wa, ba = linear(ks[2], ks[3], HIDDEN, OUTPUT_FEATURES)
    wv, bv = linear(ks[4], ks[5], HIDDEN, 1)
    return w1, b1, wa, ba, wv, bv


def fuse_heads(wa, ba, wv, bv):
    """Concatenate advantage + value heads ONCE (at init time, not per call)."""
    w_head = jnp.concatenate([wa, wv], axis=1)   # (128, 3)
    b_head = jnp.concatenate([ba, bv], axis=1)   # (1, 3)
    return w_head, b_head


def reference_forward(x, w1, b1, wa, ba, wv, bv):
    h = jnp.tanh(x @ w1 + b1)
    adv = h @ wa + ba
    val = h @ wv + bv
    return val + adv - jnp.mean(adv)


if __name__ == "__main__":
    key = jax.random.PRNGKey(0)
    k_params, k_x = jax.random.split(key)

    w1, b1, wa, ba, wv, bv = init_params(k_params)
    w_head, b_head = fuse_heads(wa, ba, wv, bv)

    batch = 8
    x = jax.random.normal(k_x, (batch, INPUT_FEATURES), jnp.float32)

    out = dueling_qnet_forward(x, w1, b1, w_head, b_head)
    out = jax.block_until_ready(out)

    ref = reference_forward(x, w1, b1, wa, ba, wv, bv)
    assert out.shape == (batch, OUTPUT_FEATURES)
    assert jnp.allclose(out, ref, atol=1e-5, rtol=1e-5), (out, ref)

    print("KERNEL_OK")
</pallas_src>

<mosaic_0001>
module attributes {stable_mosaic.version = 11 : i64} {
  func.func @dueling_qnet_kernel(%arg0: memref<8x4xf32, #tpu.memory_space<vmem>>, %arg1: memref<4x128xf32, #tpu.memory_space<vmem>>, %arg2: memref<1x128xf32, #tpu.memory_space<vmem>>, %arg3: memref<128x3xf32, #tpu.memory_space<vmem>>, %arg4: memref<1x3xf32, #tpu.memory_space<vmem>>, %arg5: memref<8x2xf32, #tpu.memory_space<vmem>>) attributes {dimension_semantics = [], scalar_prefetch = 0 : i64, scratch_operands = 0 : i64, tpu.core_type = #tpu.core_type<tc>} {
    %c0 = arith.constant 0 : index
    %c0_0 = arith.constant 0 : index
    %0 = vector.load %arg0[%c0, %c0_0] : memref<8x4xf32, #tpu.memory_space<vmem>>, vector<8x4xf32>
    %c0_1 = arith.constant 0 : index
    %c0_2 = arith.constant 0 : index
    %1 = vector.load %arg1[%c0_1, %c0_2] : memref<4x128xf32, #tpu.memory_space<vmem>>, vector<4x128xf32>
    %2 = vector.extract_strided_slice %0 {offsets = [0, 0], sizes = [8, 1], strides = [1, 1]} : vector<8x4xf32> to vector<8x1xf32>
    %3 = vector.extract_strided_slice %1 {offsets = [0, 0], sizes = [1, 128], strides = [1, 1]} : vector<4x128xf32> to vector<1x128xf32>
    %4 = vector.broadcast %2 : vector<8x1xf32> to vector<8x128xf32>
    %5 = vector.broadcast %3 : vector<1x128xf32> to vector<8x128xf32>
    %6 = arith.mulf %4, %5 : vector<8x128xf32>
    %7 = vector.extract_strided_slice %0 {offsets = [0, 1], sizes = [8, 1], strides = [1, 1]} : vector<8x4xf32> to vector<8x1xf32>
    %8 = vector.extract_strided_slice %1 {offsets = [1, 0], sizes = [1, 128], strides = [1, 1]} : vector<4x128xf32> to vector<1x128xf32>
    %9 = vector.broadcast %7 : vector<8x1xf32> to vector<8x128xf32>
    %10 = vector.broadcast %8 : vector<1x128xf32> to vector<8x128xf32>
    %11 = arith.mulf %9, %10 : vector<8x128xf32>
    %12 = arith.addf %6, %11 : vector<8x128xf32>
    %13 = vector.extract_strided_slice %0 {offsets = [0, 2], sizes = [8, 1], strides = [1, 1]} : vector<8x4xf32> to vector<8x1xf32>
    %14 = vector.extract_strided_slice %1 {offsets = [2, 0], sizes = [1, 128], strides = [1, 1]} : vector<4x128xf32> to vector<1x128xf32>
    %15 = vector.broadcast %13 : vector<8x1xf32> to vector<8x128xf32>
    %16 = vector.broadcast %14 : vector<1x128xf32> to vector<8x128xf32>
    %17 = arith.mulf %15, %16 : vector<8x128xf32>
    %18 = arith.addf %12, %17 : vector<8x128xf32>
    %19 = vector.extract_strided_slice %0 {offsets = [0, 3], sizes = [8, 1], strides = [1, 1]} : vector<8x4xf32> to vector<8x1xf32>
    %20 = vector.extract_strided_slice %1 {offsets = [3, 0], sizes = [1, 128], strides = [1, 1]} : vector<4x128xf32> to vector<1x128xf32>
    %21 = vector.broadcast %19 : vector<8x1xf32> to vector<8x128xf32>
    %22 = vector.broadcast %20 : vector<1x128xf32> to vector<8x128xf32>
    %23 = arith.mulf %21, %22 : vector<8x128xf32>
    %24 = arith.addf %18, %23 : vector<8x128xf32>
    %c0_3 = arith.constant 0 : index
    %c0_4 = arith.constant 0 : index
    %25 = vector.load %arg2[%c0_3, %c0_4] : memref<1x128xf32, #tpu.memory_space<vmem>>, vector<1x128xf32>
    %26 = vector.broadcast %25 : vector<1x128xf32> to vector<8x128xf32>
    %27 = arith.addf %24, %26 : vector<8x128xf32>
    %28 = math.tanh %27 : vector<8x128xf32>
    %c0_5 = arith.constant 0 : index
    %c0_6 = arith.constant 0 : index
    %29 = vector.load %arg3[%c0_5, %c0_6] : memref<128x3xf32, #tpu.memory_space<vmem>>, vector<128x3xf32>
    %cst = arith.constant dense<0.000000e+00> : vector<8x3xf32>
    %30 = tpu.matmul %28, %29, %cst {dimension_numbers = #tpu.dot_dimension_numbers<[1], [0], [0], [1], [0, 0, 1, 1], [], []>} : vector<8x128xf32>, vector<128x3xf32>, vector<8x3xf32> -> vector<8x3xf32>
    %c0_7 = arith.constant 0 : index
    %c0_8 = arith.constant 0 : index
    %31 = vector.load %arg4[%c0_7, %c0_8] : memref<1x3xf32, #tpu.memory_space<vmem>>, vector<1x3xf32>
    %32 = vector.broadcast %31 : vector<1x3xf32> to vector<8x3xf32>
    %33 = arith.addf %30, %32 : vector<8x3xf32>
    %34 = vector.extract_strided_slice %33 {offsets = [0, 0], sizes = [8, 2], strides = [1, 1]} : vector<8x3xf32> to vector<8x2xf32>
    %35 = vector.extract_strided_slice %33 {offsets = [0, 2], sizes = [8, 1], strides = [1, 1]} : vector<8x3xf32> to vector<8x1xf32>
    %36 = vector.shape_cast %34 : vector<8x2xf32> to vector<1x8x2xf32>
    %cst_9 = arith.constant dense<0.000000e+00> : vector<1xf32>
    %37 = vector.multi_reduction <add>, %36, %cst_9 [1, 2] : vector<1x8x2xf32> to vector<1xf32>
    %38 = vector.shape_cast %37 : vector<1xf32> to vector<1x1x1xf32>
    %39 = vector.extract %38[0, 0, 0] : f32 from vector<1x1x1xf32>
    %cst_10 = arith.constant 6.250000e-02 : f32
    %40 = arith.mulf %39, %cst_10 : f32
    %41 = vector.broadcast %35 : vector<8x1xf32> to vector<8x2xf32>
    %42 = arith.addf %41, %34 : vector<8x2xf32>
    %43 = vector.broadcast %40 : f32 to vector<8x2xf32>
    %44 = arith.subf %42, %43 : vector<8x2xf32>
    %c0_11 = arith.constant 0 : index
    %c0_12 = arith.constant 0 : index
    %45 = vector.load %arg5[%c0_11, %c0_12] : memref<8x2xf32, #tpu.memory_space<vmem>>, vector<8x2xf32>
    tpu.vector_store %arg5[%c0_11, %c0_12], %44 {strides = array<i32>} : memref<8x2xf32, #tpu.memory_space<vmem>>, vector<8x2xf32>,
    return
  }
}

</mosaic_0001>

<llo_original>
// kernel: tpu_custom_call.1
$region0: #{tpu_custom_call.1}
  #allocation0 [shape = 'u32[]', space=smem, size = 0x4, offset = 0x4, fixed_abs, tag = 'smem constant byte address 0x4 - core index']
  #allocation1 [shape = 'u32[144,128]{1,0:T(1,128)}', space=vmem, size = 0x12000, scoped, tag = 'internal scratch']
  %s0 = inlined_call_operand.vmem [shape: f32[8,4], index: 0, kind: input, shape index: {}]
  %s1 = inlined_call_operand.vmem [shape: f32[4,128], index: 1, kind: input, shape index: {}]
  %s2 = inlined_call_operand.vmem [shape: f32[1,128], index: 2, kind: input, shape index: {}]
  %s3 = inlined_call_operand.vmem [shape: f32[128,3], index: 3, kind: input, shape index: {}]
  %s4 = inlined_call_operand.vmem [shape: f32[1,3], index: 4, kind: input, shape index: {}]
  %s5 = inlined_call_operand.vmem [shape: f32[8,2], index: 5, kind: output, shape index: {}]
  %s6 = sld [smem:[#allocation0]]
  $region30: #{tpu_custom_call.1} parent=0
    _
  %s8 = ssub.s32 1, %s6
  %s9 = scalar_select 0, %s8, %s6
  // Predicated region
  $region2: #{tpu_custom_call.1} parent=0 // pred_check
    _
  $region3: #{tpu_custom_call.1} parent=0 // pred_check_branch
    %11 = sbr.rel (0) target = $region5
  $region4: #{tpu_custom_call.1} parent=0 // pred_region
    _
  $region5: #{tpu_custom_call.1} parent=0 // pred_fallthru
    _
  // Predicated region
  $region6: #{tpu_custom_call.1} parent=0 // pred_check
    _
  $region7: #{tpu_custom_call.1} parent=0 // pred_check_branch
    %13 = sbr.rel (0) target = $region9
  $region8: #{tpu_custom_call.1} parent=0 // pred_region
    _
  $region9: #{tpu_custom_call.1} parent=0 // pred_fallthru
    _
  // Predicated region
  $region10: #{tpu_custom_call.1} parent=0 // pred_check
    _
  $region11: #{tpu_custom_call.1} parent=0 // pred_check_branch
    %15 = sbr.rel (0) target = $region13
  $region12: #{tpu_custom_call.1} parent=0 // pred_region
    _
  $region13: #{tpu_custom_call.1} parent=0 // pred_fallthru
    _
  // Predicated region
  $region14: #{tpu_custom_call.1} parent=0 // pred_check
    _
  $region15: #{tpu_custom_call.1} parent=0 // pred_check_branch
    %17 = sbr.rel (0) target = $region17
  $region16: #{tpu_custom_call.1} parent=0 // pred_region
    _
  $region17: #{tpu_custom_call.1} parent=0 // pred_fallthru
    _
  // Predicated region
  $region18: #{tpu_custom_call.1} parent=0 // pred_check
    _
  $region19: #{tpu_custom_call.1} parent=0 // pred_check_branch
    %19 = sbr.rel (0) target = $region21
  $region20: #{tpu_custom_call.1} parent=0 // pred_region
    _
  $region21: #{tpu_custom_call.1} parent=0 // pred_fallthru
    _
  %v20 = vld [vmem:[%s0] sm:$0xff]
  %v21 = vld [vmem:[%s1] sm:$0xf]
  %23 = vset.pattern.permute.xlu0 0
  %24 = vperm.xlu0 %23, %v20
  %v25 = vpop.permute.xlu0 %24
  %v27 = vlaneseq
  %v28 = vshrl.u32 %v27, 7
  %v29 = vsub.s32 0, %v28
  %v30 = vrot.slane %v21, %v29
  %v31 = vmul.f32 %v25, %v30
  %32 = vset.pattern.permute.xlu0 1
  %33 = vperm.xlu0 %32, %v20
  %v34 = vpop.permute.xlu0 %33
  %v36 = vlaneseq
  %v37 = vshrl.u32 %v36, 7
  %v38 = vsub.s32 1, %v37
  %v39 = vrot.slane %v21, %v38
  %v40 = vmul.f32 %v34, %v39
  %v41 = vadd.f32 %v31, %v40
  %42 = vset.pattern.permute.xlu0 2
  %43 = vperm.xlu0 %42, %v20
  %v44 = vpop.permute.xlu0 %43
  %v46 = vlaneseq
  %v47 = vshrl.u32 %v46, 7
  %v48 = vsub.s32 2, %v47
  %v49 = vrot.slane %v21, %v48
  %v50 = vmul.f32 %v44, %v49
  %v51 = vadd.f32 %v41, %v50
  %52 = vset.pattern.permute.xlu0 3
  %53 = vperm.xlu0 %52, %v20
  %v54 = vpop.permute.xlu0 %53
  %v56 = vlaneseq
  %v57 = vshrl.u32 %v56, 7
  %v58 = vsub.s32 3, %v57
  %v59 = vrot.slane %v21, %v58
  %v60 = vmul.f32 %v54, %v59
  %v61 = vadd.f32 %v51, %v60
  %v62 = vld [vmem:[%s2] sm:$0x1]
  %v64 = vlaneseq
  %v65 = vshrl.u32 %v64, 7
  %v66 = vsub.s32 0, %v65
  %v67 = vrot.slane %v62, %v66
  %v69 = vadd.f32 %v61, %v67
  %v70 = vtanh.pop %v69
  %v71 = vld [vmem:[%s3] sm:$0xff]
  %v72 = vld [vmem:[%s3 + $0x8] sm:$0xff]
  %v73 = vld [vmem:[%s3 + $0x10] sm:$0xff]
  %v74 = vld [vmem:[%s3 + $0x18] sm:$0xff]
  %v75 = vld [vmem:[%s3 + $0x20] sm:$0xff]
  %v76 = vld [vmem:[%s3 + $0x28] sm:$0xff]
  %v77 = vld [vmem:[%s3 + $0x30] sm:$0xff]
  %v78 = vld [vmem:[%s3 + $0x38] sm:$0xff]
  %v79 = vld [vmem:[%s3 + $0x40] sm:$0xff]
  %v80 = vld [vmem:[%s3 + $0x48] sm:$0xff]
  %v81 = vld [vmem:[%s3 + $0x50] sm:$0xff]
  %v82 = vld [vmem:[%s3 + $0x58] sm:$0xff]
  %v83 = vld [vmem:[%s3 + $0x60] sm:$0xff]
  %v84 = vld [vmem:[%s3 + $0x68] sm:$0xff]
  %v85 = vld [vmem:[%s3 + $0x70] sm:$0xff]
  %v86 = vld [vmem:[%s3 + $0x78] sm:$0xff]
  %v87 = vld [vmem:[%s4] sm:$0x1]
  %v89 = vlaneseq
  %v90 = vshrl.u32 %v89, 7
  %v91 = vsub.s32 0, %v90
  %v92 = vrot.slane %v87, %v91
  %94 = vmatprep.subr.mxu0 0.0
  %95 = vmatpush1.msra.mxu0 %v86
  %96 = vmatprep.subr.mxu0 0.0
  %97 = vmatpush1.msra.mxu0 %v85
  %98 = vmatprep.subr.mxu0 0.0
  %99 = vmatpush1.msra.mxu0 %v84
  %100 = vmatprep.subr.mxu0 0.0
  %101 = vmatpush1.msra.mxu0 %v83
  %102 = vmatprep.subr.mxu0 0.0
  %103 = vmatpush1.msra.mxu0 %v82
  %104 = vmatprep.subr.mxu0 0.0
  %105 = vmatpush1.msra.mxu0 %v81
  %106 = vmatprep.subr.mxu0 0.0
  %107 = vmatpush1.msra.mxu0 %v80
  %108 = vmatprep.subr.mxu0 0.0
  %109 = vmatpush1.msra.mxu0 %v79
  %110 = vmatprep.subr.mxu0 0.0
  %111 = vmatpush1.msra.mxu0 %v78
  %112 = vmatprep.subr.mxu0 0.0
  %113 = vmatpush1.msra.mxu0 %v77
  %114 = vmatprep.subr.mxu0 0.0
  %115 = vmatpush1.msra.mxu0 %v76
  %116 = vmatprep.subr.mxu0 0.0
  %117 = vmatpush1.msra.mxu0 %v75
  %118 = vmatprep.subr.mxu0 0.0
  %119 = vmatpush1.msra.mxu0 %v74
  %120 = vmatprep.subr.mxu0 0.0
  %121 = vmatpush1.msra.mxu0 %v73
  %122 = vmatprep.subr.mxu0 0.0
  %123 = vmatpush1.msra.mxu0 %v72
  %124 = vmatprep.subr.mxu0 0.0
  %125 = vmatpush1.msra.mxu0 %v71
  %126 = vmatprep.subr.mxu0 0.0
  %127 = vmatpush2.msra.mxu0 0.0
  %128 = vmatprep.subr.mxu0 0.0
  %129 = vmatpush2.msra.mxu0 0.0
  %130 = vmatprep.subr.mxu0 0.0
  %131 = vmatpush2.msra.mxu0 0.0
  %132 = vmatprep.subr.mxu0 0.0
  %133 = vmatpush2.msra.mxu0 0.0
  %134 = vmatprep.subr.mxu0 0.0
  %135 = vmatpush2.msra.mxu0 0.0
  %136 = vmatprep.subr.mxu0 0.0
  %137 = vmatpush2.msra.mxu0 0.0
  %138 = vmatprep.subr.mxu0 0.0
  %139 = vmatpush2.msra.mxu0 0.0
  %140 = vmatprep.subr.mxu0 0.0
  %141 = vmatpush2.msra.mxu0 0.0
  %142 = vmatprep.subr.mxu0 0.0
  %143 = vmatpush2.msra.mxu0 0.0
  %144 = vmatprep.subr.mxu0 0.0
  %145 = vmatpush2.msra.mxu0 0.0
  %146 = vmatprep.subr.mxu0 0.0
  %147 = vmatpush2.msra.mxu0 0.0
  %148 = vmatprep.subr.mxu0 0.0
  %149 = vmatpush2.msra.mxu0 0.0
  %150 = vmatprep.subr.mxu0 0.0
  %151 = vmatpush2.msra.mxu0 0.0
  %152 = vmatprep.subr.mxu0 0.0
  %153 = vmatpush2.msra.mxu0 0.0
  %154 = vmatprep.subr.mxu0 0.0
  %155 = vmatpush2.msra.mxu0 0.0
  %156 = vmatprep.subr.mxu0 0.0
  %157 = vmatpush2.msra.mxu0 0.0
  %158 = vmatprep.mubr.f32.mxu0 0.0
  %159 = vmatmul.mubr.f32.gmra.mxu0 %v70
  %v160 = vpop.f32.mrf.mxu0
  %v161 = vadd.f32 %v92, %v160
  %v162 = vpop.f32.mrf.mxu0
  %163 = vdwg.mxu0
  %vm164 = vcmask 15360
  %v165 = vsel %vm164, %v161, 0.0
  %166 = vadd.xlane.f32.xlu0 %v165
  %v167 = vpop.xlane.xlu0 %166
  %v168 = vrot.slane %v167, 4
  %v169 = vadd.f32 %v167, %v168
  %v170 = vrot.slane %v169, 2
  %v171 = vadd.f32 %v169, %v170
  %v172 = vrot.slane %v171, 1
  %v173 = vadd.f32 %v171, %v172
  %s174 = vtos %v173
  %s175 = smul.f32 %s174, 0.0625
  %177 = vset.pattern.permute.xlu0 2
  %178 = vperm.xlu0 %177, %v161
  %v179 = vpop.permute.xlu0 %178
  %v181 = vadd.f32 %v179, %v161
  %v182 = vstv %s175
  %v183 = vsub.f32 %v181, %v182
  %184 = vst.msk [vmem:[%s5] sm:$0xff] %vm164, %v183
  // Predicated region
  $region22: #{tpu_custom_call.1} parent=0 // pred_check
    _
  $region23: #{tpu_custom_call.1} parent=0 // pred_check_branch
    %186 = sbr.rel (0) target = $region25
  $region24: #{tpu_custom_call.1} parent=0 // pred_region
    _
  $region25: #{tpu_custom_call.1} parent=0 // pred_fallthru
    _
  // Predicated region
  $region26: #{tpu_custom_call.1} parent=0 // pred_check
    _
  $region27: #{tpu_custom_call.1} parent=0 // pred_check_branch
    %188 = sbr.rel (0) target = $region29
  $region28: #{tpu_custom_call.1} parent=0 // pred_region
    _
  $region29: #{tpu_custom_call.1} parent=0 // pred_fallthru
    _

</llo_original>
